<compile_context>
chip_gen: v6e
topology: v6e:2x2x1
jax: 0.10.0
libtpu: 0.0.40
codegen_flags: <defaults>
</compile_context>

<pallas_src>
import math

import jax
import jax.numpy as jnp
from jax.experimental import pallas as pl
from jax.experimental.pallas import tpu as pltpu


def make_pe(channel: int, joint_num: int, time_len: int, domain: str) -> jnp.ndarray:
    """Build the positional-encoding buffer exactly like the PyTorch __init__."""
    if domain == "temporal":
        # pos_list[t * joint_num + j] = t
        pos = jnp.repeat(jnp.arange(time_len, dtype=jnp.float32), joint_num)
    elif domain == "spatial":
        # pos_list[t * joint_num + j] = j
        pos = jnp.tile(jnp.arange(joint_num, dtype=jnp.float32), time_len)
    else:
        raise ValueError(f"unknown domain {domain!r}")

    position = pos[:, None]  # (T*V, 1)
    div_term = jnp.exp(
        jnp.arange(0, channel, 2, dtype=jnp.float32) * -(math.log(10000.0) / channel)
    )  # (ceil(channel/2),)

    angles = position * div_term  # (T*V, ceil(channel/2))
    pe = jnp.zeros((time_len * joint_num, channel), dtype=jnp.float32)
    pe = pe.at[:, 0::2].set(jnp.sin(angles))
    # NOTE: cos columns are sliced to channel//2 so odd `channel` also works;
    # the PyTorch original would raise there.  Identical for even channel.
    pe = pe.at[:, 1::2].set(jnp.cos(angles)[:, : channel // 2])

    # (T*V, C) -> (T, V, C) -> (C, T, V) -> (1, C, T, V)
    pe = pe.reshape(time_len, joint_num, channel).transpose(2, 0, 1)[None, ...]
    return pe


def _add_pe_kernel(x_ref, pe_ref, o_ref):
    # x_ref / o_ref: (tb, tc, tcols) block of tb batch elements (lane-dense
    # T*V columns).  pe_ref: (tc, tcols) shared PE block (same block index for
    # every batch step -> no re-DMA).
    #
    # NOTE: edge blocks can contain padded lanes (cols rounded up to 128,
    # ragged batch/channel tails).  Their contents are garbage, but the
    # writeback is masked to the valid region, so a pure elementwise add is
    # harmless.  Do NOT add block-wide reductions here without masking first.
    o_ref[...] = x_ref[...] + pe_ref[...]  # broadcasts PE over the leading tb


def _round_up(x: int, m: int) -> int:
    return ((x + m - 1) // m) * m


def _pick_tiles(n: int, c: int, cols: int, itemsize: int, target_bytes: int = 2 << 20):
    """Pick (batch_tile, channel_tile, column_tile) for contiguous, lane-dense blocks.

    Budget: ~target_bytes per x/out pipeline buffer.  With double-buffered x,
    out and the (1/tb-sized) PE block, per-step VMEM ~= 4.25 * target_bytes:
    fits the v5e 16 MiB scoped default and the v7x 64 MiB physical VMEM
    without any vmem_limit_bytes override.
    """
    # Channel tile: full C (always legal as a full-dim block) up to 256,
    # otherwise 256-row slabs (multiple of 8; ragged edge handled by Pallas).
    tc = c if c <= 256 else 256

    # Lane tile: prefer the whole contiguous T*V row -> one contiguous DMA per
    # (batch, channel-slab).  Rounded up to a multiple of 128 so the block is
    # legal for both x's T*V columns and PE's longer time_len*V columns; fall
    # back to a smaller multiple of 128 only if a single-batch full-row slab
    # would overrun the budget.
    tcols = _round_up(cols, 128)
    if tc * tcols * itemsize > target_bytes:
        tcols = max(128, (target_bytes // (tc * itemsize)) // 128 * 128)

    # Batch tile: fold batch elements into each block to amortize the
    # ~0.35 us per-grid-step overhead, while staying within the buffer budget.
    tb = 1
    while tb < min(n, 8) and 2 * tb * tc * tcols * itemsize <= target_bytes:
        tb *= 2
    tb = min(tb, n)
    return tb, tc, tcols


def positional_encoding_forward(
    x: jnp.ndarray, pe_flat: jnp.ndarray, *, donate_x: bool = False
) -> jnp.ndarray:
    """x: (N, C, T, V);  pe_flat: (C, time_len * V) with time_len * V >= T * V."""
    n, c, t, v = x.shape
    pc, pe_cols = pe_flat.shape
    assert pc == c, "pe channel dim must match x"
    cols = t * v
    assert cols <= pe_cols, f"sequence length {t} exceeds pe buffer ({pe_cols // v})"

    if pe_flat.dtype != x.dtype:
        # Fallback only; normally hoisted to module init.  NOTE: adding in
        # x.dtype (e.g. bf16) differs from PyTorch eager (which promotes to
        # f32); negligible for a positional offset, but a deliberate choice.
        pe_flat = pe_flat.astype(x.dtype)

    itemsize = x.dtype.itemsize
    x3 = x.reshape(n, c, cols)  # layout-only (contiguous) reshape

    tb, tc, tcols = _pick_tiles(n, c, cols, itemsize)
    nc = pl.cdiv(c, tc)
    nj = pl.cdiv(cols, tcols)
    nb = pl.cdiv(n, tb)

    # Grid: (channel tiles, column tiles, batch tiles).  Batch innermost so
    # the PE block index is unchanged across consecutive steps -> no PE re-DMA.
    grid = (nc, nj, nb)

    # v7x has 2 TensorCores: if the (channel, column) tile grid collapses to a
    # single tile, shard the batch axis instead so both cores get work (each
    # core still keeps its PE block resident across its batch sub-range).
    batch_sem = "parallel" if nc * nj == 1 else "arbitrary"

    out3 = pl.pallas_call(
        _add_pe_kernel,
        out_shape=jax.ShapeDtypeStruct((n, c, cols), x.dtype),
        grid_spec=pltpu.PrefetchScalarGridSpec(
            num_scalar_prefetch=0,
            grid=grid,
            in_specs=[
                pl.BlockSpec((tb, tc, tcols), lambda ci, ji, bi: (bi, ci, ji)),
                pl.BlockSpec((tc, tcols), lambda ci, ji, bi: (ci, ji)),
            ],
            out_specs=pl.BlockSpec((tb, tc, tcols), lambda ci, ji, bi: (bi, ci, ji)),
        ),
        compiler_params=pltpu.CompilerParams(
            dimension_semantics=("parallel", "parallel", batch_sem),
        ),
        cost_estimate=pl.CostEstimate(
            flops=n * c * cols,
            transcendentals=0,
            bytes_accessed=(2 * n * c * cols + c * cols) * itemsize,
        ),
        # When x is dead after the add, reuse its HBM buffer for the output
        # (operand 0 is x3 since num_scalar_prefetch=0): avoids allocating a
        # second N*C*T*V HBM buffer around the custom call.
        input_output_aliases=({0: 0} if donate_x else {}),
    )(x3, pe_flat)

    return out3.reshape(n, c, t, v)


class PositionalEncoding:
    """JAX/Pallas mirror of the PyTorch module: buffer + flattened/cast view at init."""

    def __init__(self, channel, joint_num, time_len, domain, dtype=jnp.float32):
        self.joint_num = joint_num
        self.time_len = time_len
        self.domain = domain
        self.pe = make_pe(channel, joint_num, time_len, domain)  # (1, C, time_len, V)
        # Hoisted out of the forward path: lane-dense flatten + dtype cast once.
        self._pe_flat = self.pe.reshape(channel, time_len * joint_num).astype(dtype)

    def __call__(self, x, *, donate_x: bool = False):
        return positional_encoding_forward(x, self._pe_flat, donate_x=donate_x)


if __name__ == "__main__":
    # Small, module-consistent shapes.
    batch = 2
    channel = 4
    joint_num = 16
    time_len = 16     # buffer length
    t_in = 8          # actual sequence length in x (exercises the :x.size(2) prefix)
    domain = "spatial"

    key = jax.random.PRNGKey(0)
    x = jax.random.normal(key, (batch, channel, t_in, joint_num), dtype=jnp.float32)

    module = PositionalEncoding(channel, joint_num, time_len, domain, dtype=x.dtype)

    out = module(x)
    out = jax.block_until_ready(out)

    # Sanity check against plain-JAX reference of the forward pass.
    ref = x + module.pe[:, :, :t_in, :]
    assert out.shape == x.shape and out.dtype == x.dtype
    assert jnp.allclose(out, ref, atol=1e-6), "mismatch vs reference"

    print("KERNEL_OK")
</pallas_src>

<mosaic_0001>
module attributes {stable_mosaic.version = 11 : i64} {
  func.func @_add_pe_kernel(%arg0: i32, %arg1: i32, %arg2: i32, %arg3: memref<2x4x128xf32, #tpu.memory_space<vmem>>, %arg4: memref<4x128xf32, #tpu.memory_space<vmem>>, %arg5: memref<2x4x128xf32, #tpu.memory_space<vmem>>) attributes {dimension_semantics = [#tpu.dimension_semantics<parallel>, #tpu.dimension_semantics<parallel>, #tpu.dimension_semantics<parallel>], iteration_bounds = array<i64: 1, 1, 1>, scalar_prefetch = 0 : i64, scratch_operands = 0 : i64, tpu.core_type = #tpu.core_type<tc>, window_params = [{transform_indices = @transform_0, window_bounds = array<i64: 2, 4, 128>}, {transform_indices = @transform_1, window_bounds = array<i64: 4, 128>}, {transform_indices = @transform_2, window_bounds = array<i64: 2, 4, 128>}]} {
    %c0 = arith.constant 0 : index
    %c0_0 = arith.constant 0 : index
    %c0_1 = arith.constant 0 : index
    %0 = vector.load %arg3[%c0, %c0_0, %c0_1] : memref<2x4x128xf32, #tpu.memory_space<vmem>>, vector<2x4x128xf32>
    %c0_2 = arith.constant 0 : index
    %c0_3 = arith.constant 0 : index
    %1 = vector.load %arg4[%c0_2, %c0_3] : memref<4x128xf32, #tpu.memory_space<vmem>>, vector<4x128xf32>
    %2 = vector.shape_cast %1 : vector<4x128xf32> to vector<1x4x128xf32>
    %3 = vector.broadcast %2 : vector<1x4x128xf32> to vector<2x4x128xf32>
    %4 = arith.addf %0, %3 : vector<2x4x128xf32>
    %c0_4 = arith.constant 0 : index
    %c0_5 = arith.constant 0 : index
    %c0_6 = arith.constant 0 : index
    %5 = vector.load %arg5[%c0_4, %c0_5, %c0_6] : memref<2x4x128xf32, #tpu.memory_space<vmem>>, vector<2x4x128xf32>
    tpu.vector_store %arg5[%c0_4, %c0_5, %c0_6], %4 {strides = array<i32>} : memref<2x4x128xf32, #tpu.memory_space<vmem>>, vector<2x4x128xf32>,
    return
  }
  func.func @transform_0(%arg0: i32, %arg1: i32, %arg2: i32) -> (i32, i32, i32) {
    %c0_i32 = arith.constant 0 : i32
    return %arg2, %arg0, %arg1 : i32, i32, i32
  }
  func.func @transform_1(%arg0: i32, %arg1: i32, %arg2: i32) -> (i32, i32) {
    %c0_i32 = arith.constant 0 : i32
    return %arg0, %arg1 : i32, i32
  }
  func.func @transform_2(%arg0: i32, %arg1: i32, %arg2: i32) -> (i32, i32, i32) {
    %c0_i32 = arith.constant 0 : i32
    return %arg2, %arg0, %arg1 : i32, i32, i32
  }
}

</mosaic_0001>

<llo_original>
// kernel: tpu_custom_call.1
$region0: #{tpu_custom_call.1}
  #allocation0 [shape = 'u32[]', space=smem, size = 0x4, offset = 0x4, fixed_abs, tag = 'smem constant byte address 0x4 - core index']
  #allocation1 [shape = 'u32[144,128]{1,0:T(1,128)}', space=vmem, size = 0x12000, scoped, tag = 'internal scratch']
  %s0 = inlined_call_operand.hbm [shape: f32[2,4,128], index: 0, kind: input, shape index: {}]
  %s1 = inlined_call_operand.hbm [shape: f32[4,256], index: 1, kind: input, shape index: {}]
  %s2 = inlined_call_operand.hbm [shape: f32[2,4,128], index: 2, kind: output, shape index: {}]
  %s3 = sld [smem:[#allocation0]]
  $region26: #{tpu_custom_call.1} parent=0
    _
  %s5 = ssub.s32 1, %s3
  %s6 = scalar_select 0, %s5, %s3
  $region1: #{tpu_custom_call.1} parent=0
    #allocation2 [shape = 'u8[4096]{0}', space=vmem, size = 0x1000, scoped, tag = 'input window, operand 0, single buffered']
    #allocation3 [shape = 's32[1]{0}', space=sflag, size = 0x4, scoped, tag = 'scoped memory for tpu_custom_call.1']
    #allocation4 [shape = 's32[1]{0}', space=sflag, size = 0x4, scoped, tag = 'scoped memory for tpu_custom_call.1']
    #allocation5 [shape = 'u8[2048]{0}', space=vmem, size = 0x800, scoped, tag = 'input window, operand 1, single buffered']
    #allocation6 [shape = 's32[1]{0}', space=sflag, size = 0x4, scoped, tag = 'scoped memory for tpu_custom_call.1']
    #allocation7 [shape = 'u8[4096]{0}', space=vmem, size = 0x1000, scoped, tag = 'output window, operand 0, single buffered']
    %7 = vsyncpa [#allocation3], 0
    %8 = vsyncpa [#allocation6], 0
    %9 = vsyncpa [#allocation4], 0
    // Predicated region
    $region2: #{tpu_custom_call.1} parent=1 // pred_check
      _
    $region3: #{tpu_custom_call.1} parent=1 // pred_check_branch
      %11 = sbr.rel (0) target = $region5
    $region4: #{tpu_custom_call.1} parent=1 // pred_region
      %s13 = ssub.s32 128, 128
      %14 = vsyncadd [#allocation3], %s13
      %s15 = sshll.u32 [#allocation2], 4
      %s16 = int_to_ptr.vmem [resolvable:$true] %s15
      %21 = dma.hbm_to_vmem [thread:$0]  %s0, 128, %s16, [#allocation3], 64, 64, 4
    $region5: #{tpu_custom_call.1} parent=1 // pred_fallthru
      _
    // Predicated region
    $region6: #{tpu_custom_call.1} parent=1 // pred_check
      _
    $region7: #{tpu_custom_call.1} parent=1 // pred_check_branch
      %23 = sbr.rel (0) target = $region9
    $region8: #{tpu_custom_call.1} parent=1 // pred_region
      %s25 = ssub.s32 64, 64
      %26 = vsyncadd [#allocation6], %s25
      %s28 = sshll.u32 [#allocation5], 4
      %s29 = int_to_ptr.vmem [resolvable:$true] %s28
      %31 = dma.hbm_to_vmem [thread:$0]  %s1, 64, %s29, [#allocation6]
    $region9: #{tpu_custom_call.1} parent=1 // pred_fallthru
      _
    // Predicated region
    $region10: #{tpu_custom_call.1} parent=1 // pred_check
      _
    $region11: #{tpu_custom_call.1} parent=1 // pred_check_branch
      %33 = sbr.rel (0) target = $region13
    $region12: #{tpu_custom_call.1} parent=1 // pred_region
      %34 = dma.done [#allocation3], 128
    $region13: #{tpu_custom_call.1} parent=1 // pred_fallthru
      _
    // Predicated region
    $region14: #{tpu_custom_call.1} parent=1 // pred_check
      _
    $region15: #{tpu_custom_call.1} parent=1 // pred_check_branch
      %36 = sbr.rel (0) target = $region17
    $region16: #{tpu_custom_call.1} parent=1 // pred_region
      %37 = dma.done [#allocation6], 64
    $region17: #{tpu_custom_call.1} parent=1 // pred_fallthru
      _
    %v38 = vld [vmem:[#allocation2] sm:$0xf]
    %v39 = vld [vmem:[#allocation2 + $0x4] sm:$0xf]
    %v40 = vld [vmem:[#allocation5] sm:$0xf]
    %v41 = vadd.f32 %v38, %v40
    %v42 = vadd.f32 %v39, %v40
    %43 = vst [vmem:[#allocation7] sm:$0xf] %v41
    %44 = vst [vmem:[#allocation7 + $0x4] sm:$0xf] %v42
    // Predicated region
    $region18: #{tpu_custom_call.1} parent=1 // pred_check
      _
    $region19: #{tpu_custom_call.1} parent=1 // pred_check_branch
      %46 = sbr.rel (0) target = $region21
    $region20: #{tpu_custom_call.1} parent=1 // pred_region
      %s48 = ssub.s32 128, 128
      %49 = vsyncadd [#allocation4], %s48
      %s50 = sshll.u32 [#allocation7], 4
      %s51 = int_to_ptr.vmem [resolvable:$true] %s50
      %56 = dma.vmem_to_hbm [thread:$0]  %s51, 128, %s2, [#allocation4], 64, 64, 4
    $region21: #{tpu_custom_call.1} parent=1 // pred_fallthru
      _
    // Predicated region
    $region22: #{tpu_custom_call.1} parent=1 // pred_check
      _
    $region23: #{tpu_custom_call.1} parent=1 // pred_check_branch
      %58 = sbr.rel (0) target = $region25
    $region24: #{tpu_custom_call.1} parent=1 // pred_region
      %59 = dma.done [#allocation4], 128
    $region25: #{tpu_custom_call.1} parent=1 // pred_fallthru
      _
    %60 = vsyncpa [#allocation3], 1
    %61 = vsyncpa [#allocation6], 1
    %62 = vsyncpa [#allocation4], 1

</llo_original>
